<compile_context>
chip_gen: v7x
topology: tpu7x:2x2x1
jax: 0.10.0
libtpu: 0.0.40
codegen_flags: <defaults>
</compile_context>

<pallas_src>
import jax
import jax.numpy as jnp
from jax.experimental import pallas as pl
from jax.experimental.pallas import tpu as pltpu


def _round_up(n, m):
    return ((n + m - 1) // m) * m


def _cdiv(a, b):
    return (a + b - 1) // b


# ----------------------------- Pallas kernels (hot path) -----------------------------
def _svd_linear_kernel_folded(x_ref, wt_ref, o_ref):
    """y = x @ W.T with W.T pre-folded to (din, dout) in the wrapper."""
    x = x_ref[...].astype(wt_ref.dtype)            # in-kernel cast (bf16 on MXU path)
    y = jnp.dot(x, wt_ref[...], preferred_element_type=jnp.float32)
    o_ref[...] = y.astype(o_ref.dtype)


def _svd_linear_kernel_lowrank(x_ref, vs_ref, ut_ref, o_ref):
    """y = (x @ (V_r * sigma)) @ U_r.T  -- genuinely low-rank case only."""
    x = x_ref[...].astype(vs_ref.dtype)
    xv = jnp.dot(x, vs_ref[...], preferred_element_type=jnp.float32)
    y = jnp.dot(xv.astype(ut_ref.dtype), ut_ref[...],
                preferred_element_type=jnp.float32)
    o_ref[...] = y.astype(o_ref.dtype)


def _pick_bm(batch, block_m):
    """Batch tile: multiple of 8, <= block_m, and an even grid-step count whenever there
    is more than one step (clean megacore split on v7x; harmless elsewhere)."""
    bm = max(8, min(block_m, _round_up(batch, 8)))
    steps = _cdiv(batch, bm)
    if steps > 1 and steps % 2 == 1:
        bm_even = _round_up(_cdiv(batch, steps + 1), 8)
        if bm_even >= 8 and _cdiv(batch, bm_even) % 2 == 0:
            bm = bm_even
    return bm


def svd_linear_forward(x, U, V, sigma_diag, *, block_m=512,
                       weights_dtype=jnp.bfloat16, out_dtype=None, mode="auto"):
    """Pallas wrapper for  y = x @ W.T,  W = U @ Sigma @ V.T  with rank-r diagonal Sigma.

    mode: "auto" (fold when r is not genuinely low-rank), "folded", or "lowrank".
    Weight-side glue (scaling, fold, transpose, cast) is weight-only and should be hoisted
    out of the per-call path when weights are static across calls (inference).
    """
    orig_shape = x.shape
    din = orig_shape[-1]
    x2 = x.reshape(-1, din)
    B = x2.shape[0]
    dout = U.shape[0]
    r = sigma_diag.shape[0]
    out_dtype = x.dtype if out_dtype is None else out_dtype

    # ---- weight-side glue (one-time, weight-only) ----
    v_scaled = V[:, :r] * sigma_diag[None, :]          # (din, r)
    u_t = U[:, :r].T                                   # (r, dout)

    if mode == "auto":
        low_rank = r * (din + dout) < din * dout       # never true when r = min(din, dout)
    else:
        low_rank = (mode == "lowrank")

    # Lane alignment: pad only when dims are not already 128-multiples, so the aligned
    # hot path has zero extra HBM passes over x / y.  Batch is never padded (ragged grid).
    din_p = _round_up(din, 128)
    dout_p = _round_up(dout, 128)
    r_p = _round_up(r, 128)
    if din_p != din:
        x2 = jnp.pad(x2, ((0, 0), (0, din_p - din)))

    x_bytes = jnp.dtype(x2.dtype).itemsize
    o_bytes = jnp.dtype(out_dtype).itemsize
    w_bytes = jnp.dtype(weights_dtype).itemsize

    bm = _pick_bm(B, block_m)
    steps = _cdiv(B, bm)

    if low_rank:
        kernel = _svd_linear_kernel_lowrank
        v_w = v_scaled.astype(weights_dtype)
        u_w = u_t.astype(weights_dtype)
        if (din_p, r_p) != (din, r):
            v_w = jnp.pad(v_w, ((0, din_p - din), (0, r_p - r)))
        if (r_p, dout_p) != (r, dout):
            u_w = jnp.pad(u_w, ((0, r_p - r), (0, dout_p - dout)))
        weight_args = (v_w, u_w)
        weight_specs = [
            pl.BlockSpec((din_p, r_p), lambda i: (0, 0),
                         pipeline_mode=pl.Buffered(1)),          # V_r*sigma (resident)
            pl.BlockSpec((r_p, dout_p), lambda i: (0, 0),
                         pipeline_mode=pl.Buffered(1)),          # U_r.T (resident)
        ]
        weight_elems = din_p * r_p + r_p * dout_p
        flops = 2 * B * (din * r + r * dout)
        inter_bytes = bm * r_p * 4                               # f32 (bm, r) intermediate
    else:
        kernel = _svd_linear_kernel_folded
        # One-time fold of the rank-r factors into W.T (din, dout); full f32 precision.
        w_t = jnp.dot(v_scaled, u_t, precision=jax.lax.Precision.HIGHEST)
        w_w = w_t.astype(weights_dtype)
        if (din_p, dout_p) != (din, dout):
            w_w = jnp.pad(w_w, ((0, din_p - din), (0, dout_p - dout)))
        weight_args = (w_w,)
        weight_specs = [
            pl.BlockSpec((din_p, dout_p), lambda i: (0, 0),
                         pipeline_mode=pl.Buffered(1)),          # W.T (resident)
        ]
        weight_elems = din_p * dout_p
        flops = 2 * B * din * dout
        inter_bytes = 0

    # VMEM: double-buffered x / y tiles + single-buffered weights + f32 result/intermediate.
    vmem_need = (2 * bm * din_p * x_bytes
                 + 2 * bm * dout_p * o_bytes
                 + weight_elems * w_bytes
                 + inter_bytes
                 + bm * dout_p * 4)
    vmem_limit = int(min(max(2 * vmem_need + (4 << 20), 16 << 20), 64 << 20))

    cost = pl.CostEstimate(
        flops=flops,
        transcendentals=0,
        bytes_accessed=B * din_p * x_bytes + B * dout_p * o_bytes
                       + weight_elems * w_bytes,
    )

    y2 = pl.pallas_call(
        kernel,
        out_shape=jax.ShapeDtypeStruct((B, dout_p), out_dtype),
        grid_spec=pltpu.PrefetchScalarGridSpec(
            num_scalar_prefetch=0,
            grid=(steps,),                                        # ragged last block is fine
            in_specs=[pl.BlockSpec((bm, din_p), lambda i: (i, 0))] + weight_specs,
            out_specs=pl.BlockSpec((bm, dout_p), lambda i: (i, 0)),
        ),
        compiler_params=pltpu.CompilerParams(
            dimension_semantics=("parallel",),
            vmem_limit_bytes=vmem_limit,
        ),
        cost_estimate=cost,
    )(x2, *weight_args)

    if dout_p != dout:
        y2 = y2[:, :dout]
    return y2.reshape(orig_shape[:-1] + (dout,))


# ----------------------------- parameter construction (glue) -----------------------------
def to_orthogonal_matrix(seed):
    # TODO(synk): QR factorization has no Pallas equivalent; done in plain JAX (setup glue).
    q, rr = jnp.linalg.qr(seed)
    d = jnp.diagonal(rr)
    ph = d / jnp.abs(d)
    # Matches the PyTorch module verbatim: q @ diag(ph) @ q  (second factor is q, not q.T).
    return q @ jnp.diag(ph) @ q


def sigma_diag_from_logits(logits, min_singular_value=1e-4):
    deltas = jax.nn.softplus(logits)
    diag = jnp.flip(jnp.cumsum(deltas, axis=0), axis=0)
    # masked_fill(mask, 0.0): values below threshold are zeroed (not clamped), as in the module.
    return jnp.where(diag < min_singular_value, 0.0, diag)


def reference_forward(x, U, V, sig, dim_output, dim_input):
    """Pure-JAX reference of the PyTorch forward: inputs @ W.T (full-precision matmuls)."""
    r = sig.shape[0]
    Sigma = jnp.zeros((dim_output, dim_input), jnp.float32).at[
        jnp.arange(r), jnp.arange(r)].set(sig)
    hp = jax.lax.Precision.HIGHEST
    W = jnp.dot(jnp.dot(U, Sigma, precision=hp), V.T, precision=hp)
    return jnp.dot(x, W.T, precision=hp)


# ----------------------------- main -----------------------------
if __name__ == "__main__":
    # Primary test: lane-aligned dims, ragged batch (600 is not a multiple of bm=512).
    dim_input, dim_output, batch = 256, 128, 600
    dim_sigma = min(dim_input, dim_output)

    key = jax.random.PRNGKey(0)
    k1, k2, k3, k4 = jax.random.split(key, 4)
    sigma_logits = jax.random.normal(k1, (dim_sigma,), jnp.float32)   # _sigma_diag_logits
    U_seed = jax.random.normal(k2, (dim_output, dim_output), jnp.float32)
    V_seed = jax.random.normal(k3, (dim_input, dim_input), jnp.float32)
    x = jax.random.normal(k4, (batch, dim_input), jnp.float32)

    U = to_orthogonal_matrix(U_seed)
    V = to_orthogonal_matrix(V_seed)
    sig = sigma_diag_from_logits(sigma_logits)
    y_ref = reference_forward(x, U, V, sig, dim_output, dim_input)
    scale = float(jnp.max(jnp.abs(y_ref)))

    # f32 weights, folded single-matmul path: tight relative check of the kernel math
    # (bound leaves headroom for reduced-precision f32 MXU passes, still catches any
    # indexing / sign / folding bug by orders of magnitude).
    y32 = jax.block_until_ready(
        svd_linear_forward(x, U, V, sig, weights_dtype=jnp.float32))
    assert y32.shape == (batch, dim_output)
    err = float(jnp.max(jnp.abs(y32 - y_ref)))
    assert err <= 1e-3 * scale, f"f32 folded kernel mismatch: err={err} scale={scale}"

    # Two-factor (low-rank) kernel path, forced, f32 weights.
    ylr = jax.block_until_ready(
        svd_linear_forward(x, U, V, sig, weights_dtype=jnp.float32, mode="lowrank"))
    err = float(jnp.max(jnp.abs(ylr - y_ref)))
    assert err <= 1e-3 * scale, f"f32 low-rank kernel mismatch: err={err} scale={scale}"

    # bf16 weights/activations (MXU-native), f32 accumulation: loose check.
    ybf = jax.block_until_ready(svd_linear_forward(x, U, V, sig))
    err = float(jnp.max(jnp.abs(ybf - y_ref)))
    assert err <= 5e-2 * scale, f"bf16 kernel mismatch: err={err} scale={scale}"

    # Secondary test: odd/unaligned dims exercise the lane-padding fallback; tiny batch
    # exercises a single ragged grid step.
    di2, do2, b2 = 48, 72, 10
    r2 = min(di2, do2)
    k5, k6, k7, k8 = jax.random.split(jax.random.PRNGKey(1), 4)
    sig2 = sigma_diag_from_logits(jax.random.normal(k5, (r2,), jnp.float32))
    U2 = to_orthogonal_matrix(jax.random.normal(k6, (do2, do2), jnp.float32))
    V2 = to_orthogonal_matrix(jax.random.normal(k7, (di2, di2), jnp.float32))
    x2 = jax.random.normal(k8, (b2, di2), jnp.float32)
    y2_ref = reference_forward(x2, U2, V2, sig2, do2, di2)
    scale2 = float(jnp.max(jnp.abs(y2_ref)))
    y2 = jax.block_until_ready(
        svd_linear_forward(x2, U2, V2, sig2, weights_dtype=jnp.float32))
    assert y2.shape == (b2, do2)
    err2 = float(jnp.max(jnp.abs(y2 - y2_ref)))
    assert err2 <= 1e-3 * scale2, f"padded-path mismatch: err={err2} scale={scale2}"

    print("KERNEL_OK")
</pallas_src>

<mosaic_0001>
module attributes {stable_mosaic.version = 11 : i64} {
  func.func @_svd_linear_kernel_folded(%arg0: i32, %arg1: memref<512x256xf32, #tpu.memory_space<vmem>>, %arg2: memref<256x128xf32, #tpu.memory_space<vmem>>, %arg3: memref<512x128xf32, #tpu.memory_space<vmem>>) attributes {dimension_semantics = [#tpu.dimension_semantics<parallel>], iteration_bounds = array<i64: 2>, scalar_prefetch = 0 : i64, scratch_operands = 0 : i64, tpu.core_type = #tpu.core_type<tc>, window_params = [{transform_indices = @transform_0, window_bounds = array<i64: 512, 256>}, {pipeline_mode = #tpu.pipeline_mode<synchronous>, transform_indices = @transform_1, window_bounds = array<i64: 256, 128>}, {transform_indices = @transform_2, window_bounds = array<i64: 512, 128>}]} {
    %c0 = arith.constant 0 : index
    %c0_0 = arith.constant 0 : index
    %0 = vector.load %arg1[%c0, %c0_0] : memref<512x256xf32, #tpu.memory_space<vmem>>, vector<512x256xf32>
    %c0_1 = arith.constant 0 : index
    %c0_2 = arith.constant 0 : index
    %1 = vector.load %arg2[%c0_1, %c0_2] : memref<256x128xf32, #tpu.memory_space<vmem>>, vector<256x128xf32>
    %cst = arith.constant dense<0.000000e+00> : vector<512x128xf32>
    %2 = tpu.matmul %0, %1, %cst {dimension_numbers = #tpu.dot_dimension_numbers<[1], [0], [0], [1], [0, 0, 1, 1], [], []>} : vector<512x256xf32>, vector<256x128xf32>, vector<512x128xf32> -> vector<512x128xf32>
    %c0_3 = arith.constant 0 : index
    %c0_4 = arith.constant 0 : index
    %3 = vector.load %arg3[%c0_3, %c0_4] : memref<512x128xf32, #tpu.memory_space<vmem>>, vector<512x128xf32>
    tpu.vector_store %arg3[%c0_3, %c0_4], %2 {strides = array<i32>} : memref<512x128xf32, #tpu.memory_space<vmem>>, vector<512x128xf32>,
    return
  }
  func.func @transform_0(%arg0: i32) -> (i32, i32) {
    %c0_i32 = arith.constant 0 : i32
    %c0_i32_0 = arith.constant 0 : i32
    return %arg0, %c0_i32 : i32, i32
  }
  func.func @transform_1(%arg0: i32) -> (i32, i32) {
    %c0_i32 = arith.constant 0 : i32
    %c0_i32_0 = arith.constant 0 : i32
    %c0_i32_1 = arith.constant 0 : i32
    return %c0_i32, %c0_i32_0 : i32, i32
  }
  func.func @transform_2(%arg0: i32) -> (i32, i32) {
    %c0_i32 = arith.constant 0 : i32
    %c0_i32_0 = arith.constant 0 : i32
    return %arg0, %c0_i32 : i32, i32
  }
}

</mosaic_0001>

<llo_original>
// kernel: tpu_custom_call.1
$region0: #{tpu_custom_call.1}
  #allocation0 [shape = 'u32[]', space=smem, size = 0x4, offset = 0x4, fixed_abs, tag = 'smem constant byte address 0x4 - core index']
  #allocation1 [shape = 'u32[144,128]{1,0:T(1,128)}', space=vmem, size = 0x12000, scoped, tag = 'internal scratch']
  %s0 = inlined_call_operand.hbm [shape: f32[600,256], index: 0, kind: input, shape index: {}]
  %s1 = inlined_call_operand.hbm [shape: f32[256,128], index: 1, kind: input, shape index: {}]
  %s2 = inlined_call_operand.hbm [shape: f32[600,128], index: 2, kind: output, shape index: {}]
  %s3 = sld [smem:[#allocation0]]
  $region49: #{tpu_custom_call.1} parent=0
    _
  %s5 = ssub.s32 1, %s3
  %s6 = scalar_select 0, %s5, %s3
  $region1: #{tpu_custom_call.1} parent=0
    #allocation2 [shape = 'u8[1048576]{0}', space=vmem, size = 0x100000, scoped, tag = 'input window, operand 0']
    #allocation3 [shape = 's32[2]{0}', space=sflag, size = 0x8, scoped, tag = 'scoped memory for tpu_custom_call.1']
    #allocation4 [shape = 's32[2]{0}', space=sflag, size = 0x8, scoped, tag = 'scoped memory for tpu_custom_call.1']
    #allocation5 [shape = 'u8[131072]{0}', space=vmem, size = 0x20000, scoped, tag = 'input window, operand 1, single buffered']
    #allocation6 [shape = 's32[1]{0}', space=sflag, size = 0x4, scoped, tag = 'scoped memory for tpu_custom_call.1']
    #allocation7 [shape = 'u8[524288]{0}', space=vmem, size = 0x80000, scoped, tag = 'output window, operand 0']
    %7 = vsyncpa [#allocation3], 0
    %s8 = scalar_lea.sflag [#allocation3], 1
    %9 = vsyncpa %s8, 0
    %10 = vsyncpa [#allocation6], 0
    %11 = vsyncpa [#allocation4], 0
    %s12 = scalar_lea.sflag [#allocation4], 1
    %13 = vsyncpa %s12, 0
    loop: start=0, step=1, limit=4
    $region2: #{tpu_custom_call.1} parent=1 // loop_pre_header
      _
    $region3: #{tpu_custom_call.1} parent=1 // loop_header
      %s15 = sphi 0, %s19
      %p16 = scmp.ge.s32.totalorder %s15, 4
      %s25 = sphi 0, %s27
      %s28 = sphi 0, %s25
      %s29 = sphi 0, %s28
      %s45 = sphi 0, %s29
      %s49 = sphi 0, %s49
      %s51 = sphi 0, %s49
      %s52 = sphi 0, %s51
      %s66 = sphi 0, %s52
      %s72 = sphi 0, %s74
      %s75 = sphi 0, %s72
      %s76 = sphi 0, %s75
      %s92 = sphi 0, %s76
    $region4: #{tpu_custom_call.1} parent=1 // loop_header_branch
      %18 = sbr.rel (%p16) target = $region8
    $region5: #{tpu_custom_call.1} parent=1 // loop_body
      %s20 = ssub.s32 %s15, 1
      %s21 = ssub.s32 %s15, 2
      %s22 = sadd.s32 %s15, 1
      %s23 = ssub.s32 %s15, %s22
      %p24 = scmp.eq.s32.totalorder %s23, 0
      %s26 = sadd.s32 %s25, 1
      %s27 = scalar_select %p24, %s25, %s26
      %p30 = pneg %p24
      %p31 = scmp.eq.s32.totalorder %s15, 1
      %p32 = por %p30, %p31
      %p33 = scmp.ne.s32.totalorder %s25, %s28
      %p34 = scmp.eq.s32.totalorder %s15, 0
      %p35 = por %p33, %p34
      %p36 = scmp.ne.s32.totalorder %s25, %s28
      %p37 = scmp.eq.s32.totalorder %s20, 1
      %p38 = por %p36, %p37
      %p39 = scmp.ne.s32.totalorder %s28, %s29
      %p40 = scmp.eq.s32.totalorder %s20, 0
      %p41 = por %p39, %p40
      %p42 = scmp.ne.s32.totalorder %s28, %s29
      %p43 = scmp.eq.s32.totalorder %s21, 1
      %p44 = por %p42, %p43
      %p46 = scmp.ne.s32.totalorder %s29, %s45
      %p47 = scmp.eq.s32.totalorder %s21, 0
      %p48 = por %p46, %p47
      %s50 = sadd.s32 %s49, 1
      %p53 = scmp.eq.s32.totalorder %s15, 1
      %p54 = scmp.ne.s32.totalorder %s49, %s51
      %p55 = scmp.eq.s32.totalorder %s15, 0
      %p56 = por %p54, %p55
      %p57 = scmp.ne.s32.totalorder %s49, %s51
      %p58 = scmp.eq.s32.totalorder %s20, 1
      %p59 = por %p57, %p58
      %p60 = scmp.ne.s32.totalorder %s51, %s52
      %p61 = scmp.eq.s32.totalorder %s20, 0
      %p62 = por %p60, %p61
      %p63 = scmp.ne.s32.totalorder %s51, %s52
      %p64 = scmp.eq.s32.totalorder %s21, 1
      %p65 = por %p63, %p64
      %p67 = scmp.ne.s32.totalorder %s52, %s66
      %p68 = scmp.eq.s32.totalorder %s21, 0
      %p69 = por %p67, %p68
      %s70 = ssub.s32 %s15, %s22
      %p71 = scmp.eq.s32.totalorder %s70, 0
      %s73 = sadd.s32 %s72, 1
      %s74 = scalar_select %p71, %s72, %s73
      %p77 = pneg %p71
      %p78 = scmp.eq.s32.totalorder %s15, 1
      %p79 = por %p77, %p78
      %p80 = scmp.ne.s32.totalorder %s72, %s75
      %p81 = scmp.eq.s32.totalorder %s15, 0
      %p82 = por %p80, %p81
      %p83 = scmp.ne.s32.totalorder %s72, %s75
      %p84 = scmp.eq.s32.totalorder %s20, 1
      %p85 = por %p83, %p84
      %p86 = scmp.ne.s32.totalorder %s75, %s76
      %p87 = scmp.eq.s32.totalorder %s20, 0
      %p88 = por %p86, %p87
      %p89 = scmp.ne.s32.totalorder %s75, %s76
      %p90 = scmp.eq.s32.totalorder %s21, 1
      %p91 = por %p89, %p90
      %p93 = scmp.ne.s32.totalorder %s76, %s92
      %p94 = scmp.eq.s32.totalorder %s21, 0
      %p95 = por %p93, %p94
      %p96 = scmp.le.s32.totalorder 1, %s15
      %p97 = scmp.lt.s32.totalorder %s15, 3
      %p98 = pnand %p96, %p97
      %p99 = pneg %p98
      // Predicated region
      $region9: #{tpu_custom_call.1} parent=5 // pred_check
        _
      $region10: #{tpu_custom_call.1} parent=5 // pred_check_branch
        %101 = sbr.rel (%p98) target = $region12
      $region11: #{tpu_custom_call.1} parent=5 // pred_region
        %s102 = ssub.s32 %s15, 1
        // Predicated region
        $region13: #{tpu_custom_call.1} parent=11 // pred_check
          %p103 = pneg %p62
        $region14: #{tpu_custom_call.1} parent=11 // pred_check_branch
          %105 = sbr.rel (%p103) target = $region16
        $region15: #{tpu_custom_call.1} parent=11 // pred_region
          %s107 = ssub.s32 4096, 4096
          %108 = vsyncadd [#allocation6], %s107
          %s109 = sshll.u32 [#allocation5], 4
          %s110 = int_to_ptr.vmem [resolvable:$true] %s109
          %115 = dma.hbm_to_vmem [thread:$0]  %s1, 4096, %s110, [#allocation6], 128, 128, 8
        $region16: #{tpu_custom_call.1} parent=11 // pred_fallthru
          _
      $region12: #{tpu_custom_call.1} parent=5 // pred_fallthru
        _
      %p116 = scmp.lt.s32.totalorder %s15, 2
      // Predicated region
      $region17: #{tpu_custom_call.1} parent=5 // pred_check
        %p117 = pneg %p116
      $region18: #{tpu_custom_call.1} parent=5 // pred_check_branch
        %119 = sbr.rel (%p117) target = $region20
      $region19: #{tpu_custom_call.1} parent=5 // pred_region
        // Predicated region
        $region21: #{tpu_custom_call.1} parent=19 // pred_check
          %p120 = pneg %p35
        $region22: #{tpu_custom_call.1} parent=19 // pred_check_branch
          %122 = sbr.rel (%p120) target = $region24
        $region23: #{tpu_custom_call.1} parent=19 // pred_region
          %s123 = sand.u32 %s25, 1
          %s124 = scalar_lea.sflag [#allocation3], %s123
          %s125 = sand.u32 %s25, 1
          %s126 = smul.addr %s125, 1024
          %s127 = scalar_lea.vmem [#allocation2], %s126
          %s128 = smul.u32 64, %s15
          %s129 = ssub.s32 75, %s128
          %p130 = scmp.lt.s32.totalorder %s129, 64
          %s131 = scalar_select %p130, %s129, 64
          %s132 = smul.u32 128, %s131
          %s133 = smul.u32 %s132, 2
          %s135 = ssub.s32 16384, %s133
          %136 = vsyncadd %s124, %s135
          %p137 = scmp.ne.s32.totalorder 0, %s133
          %s138 = smul.addr %s128, 2
          %s139 = smul.addr %s138, 128
          %s140 = scalar_lea.hbm %s0, %s139
          %s141 = smul.u32 16, %s131
          %s142 = sshll.u32 %s127, 4
          %s143 = int_to_ptr.vmem [resolvable:$true] %s142
          %s144 = sshll.u32 %s141, 4
          %148 = dma.hbm_to_vmem [thread:$0]  (%p137), %s140, %s144, %s143, %s124, 256, 256, 16
        $region24: #{tpu_custom_call.1} parent=19 // pred_fallthru
          _
      $region20: #{tpu_custom_call.1} parent=5 // pred_fallthru
        _
      %p149 = scmp.le.s32.totalorder 1, %s15
      %p150 = scmp.lt.s32.totalorder %s15, 3
      %p151 = pnand %p149, %p150
      %p152 = pneg %p151
      // Predicated region
      $region25: #{tpu_custom_call.1} parent=5 // pred_check
        _
      $region26: #{tpu_custom_call.1} parent=5 // pred_check_branch
        %154 = sbr.rel (%p151) target = $region28
      $region27: #{tpu_custom_call.1} parent=5 // pred_region
        %s155 = ssub.s32 %s15, 1
        %s156 = sand.u32 %s28, 1
        %s157 = scalar_lea.sflag [#allocation3], %s156
        %s158 = sand.u32 %s28, 1
        %s159 = smul.addr %s158, 1024
        %s160 = scalar_lea.vmem [#allocation2], %s159
        // Predicated region
        $region29: #{tpu_custom_call.1} parent=27 // pred_check
          %p161 = pneg %p41
        $region30: #{tpu_custom_call.1} parent=27 // pred_check_branch
          %163 = sbr.rel (%p161) target = $region32
        $region31: #{tpu_custom_call.1} parent=27 // pred_region
          %164 = dma.done %s157, 16384
        $region32: #{tpu_custom_call.1} parent=27 // pred_fallthru
          _
        // Predicated region
        $region33: #{tpu_custom_call.1} parent=27 // pred_check
          %p165 = pneg %p62
        $region34: #{tpu_custom_call.1} parent=27 // pred_check_branch
          %167 = sbr.rel (%p165) target = $region36
        $region35: #{tpu_custom_call.1} parent=27 // pred_region
          %168 = dma.done [#allocation6], 4096
        $region36: #{tpu_custom_call.1} parent=27 // pred_fallthru
          _
        %s169 = sand.u32 %s28, 1
        %s170 = scalar_lea.sflag [#allocation3], %s169
        %s171 = sand.u32 %s28, 1
        %s172 = smul.addr %s171, 1024
        %s173 = scalar_lea.vmem [#allocation2], %s172
        %p174 = pneg %p41
        %p175 = pneg %p38
        %p176 = pneg %p62
        %p177 = pneg %p59
        %p178 = pneg %p88
        %p179 = pneg %p85
        %s180 = sand.u32 %s75, 1
        %s181 = scalar_lea.sflag [#allocation4], %s180
        %s182 = sand.u32 %s75, 1
        %s183 = smul.addr %s182, 512
        %s184 = scalar_lea.vmem [#allocation7], %s183
        %s185 = smul.u32 64, %s20
        %s186 = ssub.s32 75, %s185
        %p187 = scmp.lt.s32.totalorder %s186, 64
        %s188 = scalar_select %p187, %s186, 64
        %s189 = smul.u32 128, %s188
        %s190 = smul.u32 %s189, 2
        %s191 = smul.u32 64, %s20
        %s192 = ssub.s32 75, %s191
        %p193 = scmp.lt.s32.totalorder %s192, 64
        %s194 = scalar_select %p193, %s192, 64
        %s195 = smul.u32 128, %s194
        %v196 = vld [vmem:[%s160] sm:$0xff]
        %v197 = vld [vmem:[%s160 + $0x8] sm:$0xff]
        %v198 = vld [vmem:[%s160 + $0x10] sm:$0xff]
        %v199 = vld [vmem:[%s160 + $0x18] sm:$0xff]
        %v200 = vld [vmem:[%s160 + $0x20] sm:$0xff]
        %v201 = vld [vmem:[%s160 + $0x28] sm:$0xff]
        %v202 = vld [vmem:[%s160 + $0x30] sm:$0xff]
        %v203 = vld [vmem:[%s160 + $0x38] sm:$0xff]
        %v204 = vld [vmem:[%s160 + $0x40] sm:$0xff]
        %v205 = vld [vmem:[%s160 + $0x48] sm:$0xff]
        %v206 = vld [vmem:[%s160 + $0x50] sm:$0xff]
        %v207 = vld [vmem:[%s160 + $0x58] sm:$0xff]
        %v208 = vld [vmem:[%s160 + $0x60] sm:$0xff]
        %v209 = vld [vmem:[%s160 + $0x68] sm:$0xff]
        %v210 = vld [vmem:[%s160 + $0x70] sm:$0xff]
        %v211 = vld [vmem:[%s160 + $0x78] sm:$0xff]
        %v212 = vld [vmem:[%s160 + $0x80] sm:$0xff]
        %v213 = vld [vmem:[%s160 + $0x88] sm:$0xff]
        %v214 = vld [vmem:[%s160 + $0x90] sm:$0xff]
        %v215 = vld [vmem:[%s160 + $0x98] sm:$0xff]
        %v216 = vld [vmem:[%s160 + $0xa0] sm:$0xff]
        %v217 = vld [vmem:[%s160 + $0xa8] sm:$0xff]
        %v218 = vld [vmem:[%s160 + $0xb0] sm:$0xff]
        %v219 = vld [vmem:[%s160 + $0xb8] sm:$0xff]
        %v220 = vld [vmem:[%s160 + $0xc0] sm:$0xff]
        %v221 = vld [vmem:[%s160 + $0xc8] sm:$0xff]
        %v222 = vld [vmem:[%s160 + $0xd0] sm:$0xff]
        %v223 = vld [vmem:[%s160 + $0xd8] sm:$0xff]
        %v224 = vld [vmem:[%s160 + $0xe0] sm:$0xff]
        %v225 = vld [vmem:[%s160 + $0xe8] sm:$0xff]
        %v226 = vld [vmem:[%s160 + $0xf0] sm:$0xff]
        %v227 = vld [vmem:[%s160 + $0xf8] sm:$0xff]
        %v228 = vld [vmem:[%s160 + $0x100] sm:$0xff]
        %v229 = vld [vmem:[%s160 + $0x108] sm:$0xff]
        %v230 = vld [vmem:[%s160 + $0x110] sm:$0xff]
        %v231 = vld [vmem:[%s160 + $0x118] sm:$0xff]
        %v232 = vld [vmem:[%s160 + $0x120] sm:$0xff]
        %v233 = vld [vmem:[%s160 + $0x128] sm:$0xff]
        %v234 = vld [vmem:[%s160 + $0x130] sm:$0xff]
        %v235 = vld [vmem:[%s160 + $0x138] sm:$0xff]
        %v236 = vld [vmem:[%s160 + $0x140] sm:$0xff]
        %v237 = vld [vmem:[%s160 + $0x148] sm:$0xff]
        %v238 = vld [vmem:[%s160 + $0x150] sm:$0xff]
        %v239 = vld [vmem:[%s160 + $0x158] sm:$0xff]
        %v240 = vld [vmem:[%s160 + $0x160] sm:$0xff]
        %v241 = vld [vmem:[%s160 + $0x168] sm:$0xff]
        %v242 = vld [vmem:[%s160 + $0x170] sm:$0xff]
        %v243 = vld [vmem:[%s160 + $0x178] sm:$0xff]
        %v244 = vld [vmem:[%s160 + $0x180] sm:$0xff]
        %v245 = vld [vmem:[%s160 + $0x188] sm:$0xff]
        %v246 = vld [vmem:[%s160 + $0x190] sm:$0xff]
        %v247 = vld [vmem:[%s160 + $0x198] sm:$0xff]
        %v248 = vld [vmem:[%s160 + $0x1a0] sm:$0xff]
        %v249 = vld [vmem:[%s160 + $0x1a8] sm:$0xff]
        %v250 = vld [vmem:[%s160 + $0x1b0] sm:$0xff]
        %v251 = vld [vmem:[%s160 + $0x1b8] sm:$0xff]
        %v252 = vld [vmem:[%s160 + $0x1c0] sm:$0xff]
        %v253 = vld [vmem:[%s160 + $0x1c8] sm:$0xff]
        %v254 = vld [vmem:[%s160 + $0x1d0] sm:$0xff]
        %v255 = vld [vmem:[%s160 + $0x1d8] sm:$0xff]
        %v256 = vld [vmem:[%s160 + $0x1e0] sm:$0xff]
        %v257 = vld [vmem:[%s160 + $0x1e8] sm:$0xff]
        %v258 = vld [vmem:[%s160 + $0x1f0] sm:$0xff]
        %v259 = vld [vmem:[%s160 + $0x1f8] sm:$0xff]
        %v260 = vld [vmem:[%s160 + $0x200] sm:$0xff]
        %v261 = vld [vmem:[%s160 + $0x208] sm:$0xff]
        %v262 = vld [vmem:[%s160 + $0x210] sm:$0xff]
        %v263 = vld [vmem:[%s160 + $0x218] sm:$0xff]
        %v264 = vld [vmem:[%s160 + $0x220] sm:$0xff]
        %v265 = vld [vmem:[%s160 + $0x228] sm:$0xff]
        %v266 = vld [vmem:[%s160 + $0x230] sm:$0xff]
        %v267 = vld [vmem:[%s160 + $0x238] sm:$0xff]
        %v268 = vld [vmem:[%s160 + $0x240] sm:$0xff]
        %v269 = vld [vmem:[%s160 + $0x248] sm:$0xff]
        %v270 = vld [vmem:[%s160 + $0x250] sm:$0xff]
        %v271 = vld [vmem:[%s160 + $0x258] sm:$0xff]
        %v272 = vld [vmem:[%s160 + $0x260] sm:$0xff]
        %v273 = vld [vmem:[%s160 + $0x268] sm:$0xff]
        %v274 = vld [vmem:[%s160 + $0x270] sm:$0xff]
        %v275 = vld [vmem:[%s160 + $0x278] sm:$0xff]
        %v276 = vld [vmem:[%s160 + $0x280] sm:$0xff]
        %v277 = vld [vmem:[%s160 + $0x288] sm:$0xff]
        %v278 = vld [vmem:[%s160 + $0x290] sm:$0xff]
        %v279 = vld [vmem:[%s160 + $0x298] sm:$0xff]
        %v280 = vld [vmem:[%s160 + $0x2a0] sm:$0xff]
        %v281 = vld [vmem:[%s160 + $0x2a8] sm:$0xff]
        %v282 = vld [vmem:[%s160 + $0x2b0] sm:$0xff]
        %v283 = vld [vmem:[%s160 + $0x2b8] sm:$0xff]
        %v284 = vld [vmem:[%s160 + $0x2c0] sm:$0xff]
        %v285 = vld [vmem:[%s160 + $0x2c8] sm:$0xff]
        %v286 = vld [vmem:[%s160 + $0x2d0] sm:$0xff]
        %v287 = vld [vmem:[%s160 + $0x2d8] sm:$0xff]
        %v288 = vld [vmem:[%s160 + $0x2e0] sm:$0xff]
        %v289 = vld [vmem:[%s160 + $0x2e8] sm:$0xff]
        %v290 = vld [vmem:[%s160 + $0x2f0] sm:$0xff]
        %v291 = vld [vmem:[%s160 + $0x2f8] sm:$0xff]
        %v292 = vld [vmem:[%s160 + $0x300] sm:$0xff]
        %v293 = vld [vmem:[%s160 + $0x308] sm:$0xff]
        %v294 = vld [vmem:[%s160 + $0x310] sm:$0xff]
        %v295 = vld [vmem:[%s160 + $0x318] sm:$0xff]
        %v296 = vld [vmem:[%s160 + $0x320] sm:$0xff]
        %v297 = vld [vmem:[%s160 + $0x328] sm:$0xff]
        %v298 = vld [vmem:[%s160 + $0x330] sm:$0xff]
        %v299 = vld [vmem:[%s160 + $0x338] sm:$0xff]
        %v300 = vld [vmem:[%s160 + $0x340] sm:$0xff]
        %v301 = vld [vmem:[%s160 + $0x348] sm:$0xff]
        %v302 = vld [vmem:[%s160 + $0x350] sm:$0xff]
        %v303 = vld [vmem:[%s160 + $0x358] sm:$0xff]
        %v304 = vld [vmem:[%s160 + $0x360] sm:$0xff]
        %v305 = vld [vmem:[%s160 + $0x368] sm:$0xff]
        %v306 = vld [vmem:[%s160 + $0x370] sm:$0xff]
        %v307 = vld [vmem:[%s160 + $0x378] sm:$0xff]
        %v308 = vld [vmem:[%s160 + $0x380] sm:$0xff]
        %v309 = vld [vmem:[%s160 + $0x388] sm:$0xff]
        %v310 = vld [vmem:[%s160 + $0x390] sm:$0xff]
        %v311 = vld [vmem:[%s160 + $0x398] sm:$0xff]
        %v312 = vld [vmem:[%s160 + $0x3a0] sm:$0xff]
        %v313 = vld [vmem:[%s160 + $0x3a8] sm:$0xff]
        %v314 = vld [vmem:[%s160 + $0x3b0] sm:$0xff]
        %v315 = vld [vmem:[%s160 + $0x3b8] sm:$0xff]
        %v316 = vld [vmem:[%s160 + $0x3c0] sm:$0xff]
        %v317 = vld [vmem:[%s160 + $0x3c8] sm:$0xff]
        %v318 = vld [vmem:[%s160 + $0x3d0] sm:$0xff]
        %v319 = vld [vmem:[%s160 + $0x3d8] sm:$0xff]
        %v320 = vld [vmem:[%s160 + $0x3e0] sm:$0xff]
        %v321 = vld [vmem:[%s160 + $0x3e8] sm:$0xff]
        %v322 = vld [vmem:[%s160 + $0x3f0] sm:$0xff]
        %v323 = vld [vmem:[%s160 + $0x3f8] sm:$0xff]
        %v324 = vld [vmem:[#allocation5] sm:$0xff]
        %v325 = vld [vmem:[#allocation5 + $0x8] sm:$0xff]
        %v326 = vld [vmem:[#allocation5 + $0x10] sm:$0xff]
        %v327 = vld [vmem:[#allocation5 + $0x18] sm:$0xff]
        %v328 = vld [vmem:[#allocation5 + $0x20] sm:$0xff]
        %v329 = vld [vmem:[#allocation5 + $0x28] sm:$0xff]
        %v330 = vld [vmem:[#allocation5 + $0x30] sm:$0xff]
        %v331 = vld [vmem:[#allocation5 + $0x38] sm:$0xff]
        %v332 = vld [vmem:[#allocation5 + $0x40] sm:$0xff]
        %v333 = vld [vmem:[#allocation5 + $0x48] sm:$0xff]
        %v334 = vld [vmem:[#allocation5 + $0x50] sm:$0xff]
        %v335 = vld [vmem:[#allocation5 + $0x58] sm:$0xff]
        %v336 = vld [vmem:[#allocation5 + $0x60] sm:$0xff]
        %v337 = vld [vmem:[#allocation5 + $0x68] sm:$0xff]
        %v338 = vld [vmem:[#allocation5 + $0x70] sm:$0xff]
        %v339 = vld [vmem:[#allocation5 + $0x78] sm:$0xff]
        %v340 = vld [vmem:[#allocation5 + $0x80] sm:$0xff]
        %v341 = vld [vmem:[#allocation5 + $0x88] sm:$0xff]
        %v342 = vld [vmem:[#allocation5 + $0x90] sm:$0xff]
        %v343 = vld [vmem:[#allocation5 + $0x98] sm:$0xff]
        %v344 = vld [vmem:[#allocation5 + $0xa0] sm:$0xff]
        %v345 = vld [vmem:[#allocation5 + $0xa8] sm:$0xff]
        %v346 = vld [vmem:[#allocation5 + $0xb0] sm:$0xff]
        %v347 = vld [vmem:[#allocation5 + $0xb8] sm:$0xff]
        %v348 = vld [vmem:[#allocation5 + $0xc0] sm:$0xff]
        %v349 = vld [vmem:[#allocation5 + $0xc8] sm:$0xff]
        %v350 = vld [vmem:[#allocation5 + $0xd0] sm:$0xff]
        %v351 = vld [vmem:[#allocation5 + $0xd8] sm:$0xff]
        %v352 = vld [vmem:[#allocation5 + $0xe0] sm:$0xff]
        %v353 = vld [vmem:[#allocation5 + $0xe8] sm:$0xff]
        %v354 = vld [vmem:[#allocation5 + $0xf0] sm:$0xff]
        %v355 = vld [vmem:[#allocation5 + $0xf8] sm:$0xff]
        %356 = vmatprep.subr.mxu0 0.0
        %357 = vmatpush1.msra.mxu0 %v324
        %358 = vmatprep.subr.mxu0 0.0
        %359 = vmatpush1.msra.mxu0 %v325
        %360 = vmatprep.subr.mxu0 0.0
        %361 = vmatpush1.msra.mxu0 %v326
        %362 = vmatprep.subr.mxu0 0.0
        %363 = vmatpush1.msra.mxu0 %v327
        %364 = vmatprep.subr.mxu0 0.0
        %365 = vmatpush1.msra.mxu0 %v328
        %366 = vmatprep.subr.mxu0 0.0
        %367 = vmatpush1.msra.mxu0 %v329
        %368 = vmatprep.subr.mxu0 0.0
        %369 = vmatpush1.msra.mxu0 %v330
        %370 = vmatprep.subr.mxu0 0.0
        %371 = vmatpush1.msra.mxu0 %v331
        %372 = vmatprep.subr.mxu0 0.0
        %373 = vmatpush1.msra.mxu0 %v332
        %374 = vmatprep.subr.mxu0 0.0
        %375 = vmatpush1.msra.mxu0 %v333
        %376 = vmatprep.subr.mxu0 0.0
        %377 = vmatpush1.msra.mxu0 %v334
        %378 = vmatprep.subr.mxu0 0.0
        %379 = vmatpush1.msra.mxu0 %v335
        %380 = vmatprep.subr.mxu0 0.0
        %381 = vmatpush1.msra.mxu0 %v336
        %382 = vmatprep.subr.mxu0 0.0
        %383 = vmatpush1.msra.mxu0 %v337
        %384 = vmatprep.subr.mxu0 0.0
        %385 = vmatpush1.msra.mxu0 %v338
        %386 = vmatprep.subr.mxu0 0.0
        %387 = vmatpush1.msra.mxu0 %v339
        %388 = vmatprep.subr.mxu0 0.0
        %389 = vmatpush1.msra.mxu0 %v340
        %390 = vmatprep.subr.mxu0 0.0
        %391 = vmatpush1.msra.mxu0 %v341
        %392 = vmatprep.subr.mxu0 0.0
        %393 = vmatpush1.msra.mxu0 %v342
        %394 = vmatprep.subr.mxu0 0.0
        %395 = vmatpush1.msra.mxu0 %v343
        %396 = vmatprep.subr.mxu0 0.0
        %397 = vmatpush1.msra.mxu0 %v344
        %398 = vmatprep.subr.mxu0 0.0
        %399 = vmatpush1.msra.mxu0 %v345
        %400 = vmatprep.subr.mxu0 0.0
        %401 = vmatpush1.msra.mxu0 %v346
        %402 = vmatprep.subr.mxu0 0.0
        %403 = vmatpush1.msra.mxu0 %v347
        %404 = vmatprep.subr.mxu0 0.0
        %405 = vmatpush1.msra.mxu0 %v348
        %406 = vmatprep.subr.mxu0 0.0
        %407 = vmatpush1.msra.mxu0 %v349
        %408 = vmatprep.subr.mxu0 0.0
        %409 = vmatpush1.msra.mxu0 %v350
        %410 = vmatprep.subr.mxu0 0.0
        %411 = vmatpush1.msra.mxu0 %v351
        %412 = vmatprep.subr.mxu0 0.0
        %413 = vmatpush1.msra.mxu0 %v352
        %414 = vmatprep.subr.mxu0 0.0
        %415 = vmatpush1.msra.mxu0 %v353
        %416 = vmatprep.subr.mxu0 0.0
        %417 = vmatpush1.msra.mxu0 %v354
        %418 = vmatprep.subr.mxu0 0.0
        %419 = vmatpush1.msra.mxu0 %v355
        %420 = vmatprep.mubr.f32.mxu0 %v197
        %421 = vmatmul.mubr.f32.gmra.mrb[0].mxu0 %v196
        %v422 = vpop.f32.mrb[0].mxu0
        %v423 = vadd.f32 0.0, %v422
        %v424 = vpop.f32.mrb[0].mxu0
        %425 = vmatprep.mubr.f32.mxu0 %v199
        %426 = vmatmul.mubr.f32.gmra.mrb[0].mxu0 %v198
        %v427 = vpop.f32.mrb[0].mxu0
        %v428 = vadd.f32 0.0, %v427
        %v429 = vpop.f32.mrb[0].mxu0
        %430 = vmatprep.mubr.f32.mxu0 %v201
        %431 = vmatmul.mubr.f32.gmra.mrb[0].mxu0 %v200
        %v432 = vpop.f32.mrb[0].mxu0
        %v433 = vadd.f32 0.0, %v432
        %v434 = vpop.f32.mrb[0].mxu0
        %435 = vmatprep.mubr.f32.mxu0 %v203
        %436 = vmatmul.mubr.f32.gmra.mrb[0].mxu0 %v202
        %v437 = vpop.f32.mrb[0].mxu0
        %v438 = vadd.f32 0.0, %v437
        %v439 = vpop.f32.mrb[0].mxu0
        %440 = vmatprep.mubr.f32.mxu0 %v205
        %441 = vmatmul.mubr.f32.gmra.mrb[0].mxu0 %v204
        %v442 = vpop.f32.mrb[0].mxu0
        %v443 = vadd.f32 0.0, %v442
        %v444 = vpop.f32.mrb[0].mxu0
        %445 = vmatprep.mubr.f32.mxu0 %v207
        %446 = vmatmul.mubr.f32.gmra.mrb[0].mxu0 %v206
        %v447 = vpop.f32.mrb[0].mxu0
        %v448 = vadd.f32 0.0, %v447
        %v449 = vpop.f32.mrb[0].mxu0
        %450 = vmatprep.mubr.f32.mxu0 %v209
        %451 = vmatmul.mubr.f32.gmra.mrb[0].mxu0 %v208
        %v452 = vpop.f32.mrb[0].mxu0
        %v453 = vadd.f32 0.0, %v452
        %v454 = vpop.f32.mrb[0].mxu0
        %455 = vmatprep.mubr.f32.mxu0 %v211
        %456 = vmatmul.mubr.f32.gmra.mrb[0].mxu0 %v210
        %v457 = vpop.f32.mrb[0].mxu0
        %v458 = vadd.f32 0.0, %v457
        %v459 = vpop.f32.mrb[0].mxu0
        %460 = vmatprep.mubr.f32.mxu0 %v213
        %461 = vmatmul.mubr.f32.gmra.mrb[0].mxu0 %v212
        %v462 = vpop.f32.mrb[0].mxu0
        %v463 = vadd.f32 0.0, %v462
        %v464 = vpop.f32.mrb[0].mxu0
        %465 = vmatprep.mubr.f32.mxu0 %v215
        %466 = vmatmul.mubr.f32.gmra.mrb[0].mxu0 %v214
        %v467 = vpop.f32.mrb[0].mxu0
        %v468 = vadd.f32 0.0, %v467
        %v469 = vpop.f32.mrb[0].mxu0
        %470 = vmatprep.mubr.f32.mxu0 %v217
        %471 = vmatmul.mubr.f32.gmra.mrb[0].mxu0 %v216
        %v472 = vpop.f32.mrb[0].mxu0
        %v473 = vadd.f32 0.0, %v472
        %v474 = vpop.f32.mrb[0].mxu0
        %475 = vmatprep.mubr.f32.mxu0 %v219
        %476 = vmatmul.mubr.f32.gmra.mrb[0].mxu0 %v218
        %v477 = vpop.f32.mrb[0].mxu0
        %v478 = vadd.f32 0.0, %v477
        %v479 = vpop.f32.mrb[0].mxu0
        %480 = vmatprep.mubr.f32.mxu0 %v221
        %481 = vmatmul.mubr.f32.gmra.mrb[0].mxu0 %v220
        %v482 = vpop.f32.mrb[0].mxu0
        %v483 = vadd.f32 0.0, %v482
        %v484 = vpop.f32.mrb[0].mxu0
        %485 = vmatprep.mubr.f32.mxu0 %v223
        %486 = vmatmul.mubr.f32.gmra.mrb[0].mxu0 %v222
        %v487 = vpop.f32.mrb[0].mxu0
        %v488 = vadd.f32 0.0, %v487
        %v489 = vpop.f32.mrb[0].mxu0
        %490 = vmatprep.mubr.f32.mxu0 %v225
        %491 = vmatmul.mubr.f32.gmra.mrb[0].mxu0 %v224
        %v492 = vpop.f32.mrb[0].mxu0
        %v493 = vadd.f32 0.0, %v492
        %v494 = vpop.f32.mrb[0].mxu0
        %495 = vmatprep.mubr.f32.mxu0 %v227
        %496 = vmatmul.mubr.f32.gmra.mrb[0].mxu0 %v226
        %v497 = vpop.f32.mrb[0].mxu0
        %v498 = vadd.f32 0.0, %v497
        %v499 = vpop.f32.mrb[0].mxu0
        %500 = vmatprep.mubr.f32.mxu0 %v229
        %501 = vmatmul.mubr.f32.gmra.mrb[0].mxu0 %v228
        %v502 = vpop.f32.mrb[0].mxu0
        %v503 = vadd.f32 0.0, %v502
        %v504 = vpop.f32.mrb[0].mxu0
        %505 = vmatprep.mubr.f32.mxu0 %v231
        %506 = vmatmul.mubr.f32.gmra.mrb[0].mxu0 %v230
        %v507 = vpop.f32.mrb[0].mxu0
        %v508 = vadd.f32 0.0, %v507
        %v509 = vpop.f32.mrb[0].mxu0
        %510 = vmatprep.mubr.f32.mxu0 %v233
        %511 = vmatmul.mubr.f32.gmra.mrb[0].mxu0 %v232
        %v512 = vpop.f32.mrb[0].mxu0
        %v513 = vadd.f32 0.0, %v512
        %v514 = vpop.f32.mrb[0].mxu0
        %515 = vmatprep.mubr.f32.mxu0 %v235
        %516 = vmatmul.mubr.f32.gmra.mrb[0].mxu0 %v234
        %v517 = vpop.f32.mrb[0].mxu0
        %v518 = vadd.f32 0.0, %v517
        %v519 = vpop.f32.mrb[0].mxu0
        %520 = vmatprep.mubr.f32.mxu0 %v237
        %521 = vmatmul.mubr.f32.gmra.mrb[0].mxu0 %v236
        %v522 = vpop.f32.mrb[0].mxu0
        %v523 = vadd.f32 0.0, %v522
        %v524 = vpop.f32.mrb[0].mxu0
        %525 = vmatprep.mubr.f32.mxu0 %v239
        %526 = vmatmul.mubr.f32.gmra.mrb[0].mxu0 %v238
        %v527 = vpop.f32.mrb[0].mxu0
        %v528 = vadd.f32 0.0, %v527
        %v529 = vpop.f32.mrb[0].mxu0
        %530 = vmatprep.mubr.f32.mxu0 %v241
        %531 = vmatmul.mubr.f32.gmra.mrb[0].mxu0 %v240
        %v532 = vpop.f32.mrb[0].mxu0
        %v533 = vadd.f32 0.0, %v532
        %v534 = vpop.f32.mrb[0].mxu0
        %535 = vmatprep.mubr.f32.mxu0 %v243
        %536 = vmatmul.mubr.f32.gmra.mrb[0].mxu0 %v242
        %v537 = vpop.f32.mrb[0].mxu0
        %v538 = vadd.f32 0.0, %v537
        %v539 = vpop.f32.mrb[0].mxu0
        %540 = vmatprep.mubr.f32.mxu0 %v245
        %541 = vmatmul.mubr.f32.gmra.mrb[0].mxu0 %v244
        %v542 = vpop.f32.mrb[0].mxu0
        %v543 = vadd.f32 0.0, %v542
        %v544 = vpop.f32.mrb[0].mxu0
        %545 = vmatprep.mubr.f32.mxu0 %v247
        %546 = vmatmul.mubr.f32.gmra.mrb[0].mxu0 %v246
        %v547 = vpop.f32.mrb[0].mxu0
        %v548 = vadd.f32 0.0, %v547
        %v549 = vpop.f32.mrb[0].mxu0
        %550 = vmatprep.mubr.f32.mxu0 %v249
        %551 = vmatmul.mubr.f32.gmra.mrb[0].mxu0 %v248
        %v552 = vpop.f32.mrb[0].mxu0
        %v553 = vadd.f32 0.0, %v552
        %v554 = vpop.f32.mrb[0].mxu0
        %555 = vmatprep.mubr.f32.mxu0 %v251
        %556 = vmatmul.mubr.f32.gmra.mrb[0].mxu0 %v250
        %v557 = vpop.f32.mrb[0].mxu0
        %v558 = vadd.f32 0.0, %v557
        %v559 = vpop.f32.mrb[0].mxu0
        %560 = vmatprep.mubr.f32.mxu0 %v253
        %561 = vmatmul.mubr.f32.gmra.mrb[0].mxu0 %v252
        %v562 = vpop.f32.mrb[0].mxu0
        %v563 = vadd.f32 0.0, %v562
        %v564 = vpop.f32.mrb[0].mxu0
        %565 = vmatprep.mubr.f32.mxu0 %v255
        %566 = vmatmul.mubr.f32.gmra.mrb[0].mxu0 %v254
        %v567 = vpop.f32.mrb[0].mxu0
        %v568 = vadd.f32 0.0, %v567
        %v569 = vpop.f32.mrb[0].mxu0
        %570 = vmatprep.mubr.f32.mxu0 %v257
        %571 = vmatmul.mubr.f32.gmra.mrb[0].mxu0 %v256
        %v572 = vpop.f32.mrb[0].mxu0
        %v573 = vadd.f32 0.0, %v572
        %v574 = vpop.f32.mrb[0].mxu0
        %575 = vmatprep.mubr.f32.mxu0 %v259
        %576 = vmatmul.mubr.f32.gmra.mrb[0].mxu0 %v258
        %v577 = vpop.f32.mrb[0].mxu0
        %v578 = vadd.f32 0.0, %v577
        %v579 = vpop.f32.mrb[0].mxu0
        %580 = vmatprep.mubr.f32.mxu0 %v261
        %581 = vmatmul.mubr.f32.gmra.mrb[0].mxu0 %v260
        %v582 = vpop.f32.mrb[0].mxu0
        %v583 = vadd.f32 0.0, %v582
        %v584 = vpop.f32.mrb[0].mxu0
        %585 = vmatprep.mubr.f32.mxu0 %v263
        %586 = vmatmul.mubr.f32.gmra.mrb[0].mxu0 %v262
        %v587 = vpop.f32.mrb[0].mxu0
        %v588 = vadd.f32 0.0, %v587
        %v589 = vpop.f32.mrb[0].mxu0
        %590 = vmatprep.mubr.f32.mxu0 %v265
        %591 = vmatmul.mubr.f32.gmra.mrb[0].mxu0 %v264
        %v592 = vpop.f32.mrb[0].mxu0
        %v593 = vadd.f32 0.0, %v592
        %v594 = vpop.f32.mrb[0].mxu0
        %595 = vmatprep.mubr.f32.mxu0 %v267
        %596 = vmatmul.mubr.f32.gmra.mrb[0].mxu0 %v266
        %v597 = vpop.f32.mrb[0].mxu0
        %v598 = vadd.f32 0.0, %v597
        %v599 = vpop.f32.mrb[0].mxu0
        %600 = vmatprep.mubr.f32.mxu0 %v269
        %601 = vmatmul.mubr.f32.gmra.mrb[0].mxu0 %v268
        %v602 = vpop.f32.mrb[0].mxu0
        %v603 = vadd.f32 0.0, %v602
        %v604 = vpop.f32.mrb[0].mxu0
        %605 = vmatprep.mubr.f32.mxu0 %v271
        %606 = vmatmul.mubr.f32.gmra.mrb[0].mxu0 %v270
        %v607 = vpop.f32.mrb[0].mxu0
        %v608 = vadd.f32 0.0, %v607
        %v609 = vpop.f32.mrb[0].mxu0
        %610 = vmatprep.mubr.f32.mxu0 %v273
        %611 = vmatmul.mubr.f32.gmra.mrb[0].mxu0 %v272
        %v612 = vpop.f32.mrb[0].mxu0
        %v613 = vadd.f32 0.0, %v612
        %v614 = vpop.f32.mrb[0].mxu0
        %615 = vmatprep.mubr.f32.mxu0 %v275
        %616 = vmatmul.mubr.f32.gmra.mrb[0].mxu0 %v274
        %v617 = vpop.f32.mrb[0].mxu0
        %v618 = vadd.f32 0.0, %v617
        %v619 = vpop.f32.mrb[0].mxu0
        %620 = vmatprep.mubr.f32.mxu0 %v277
        %621 = vmatmul.mubr.f32.gmra.mrb[0].mxu0 %v276
        %v622 = vpop.f32.mrb[0].mxu0
        %v623 = vadd.f32 0.0, %v622
        %v624 = vpop.f32.mrb[0].mxu0
        %625 = vmatprep.mubr.f32.mxu0 %v279
        %626 = vmatmul.mubr.f32.gmra.mrb[0].mxu0 %v278
        %v627 = vpop.f32.mrb[0].mxu0
        %v628 = vadd.f32 0.0, %v627
        %v629 = vpop.f32.mrb[0].mxu0
        %630 = vmatprep.mubr.f32.mxu0 %v281
        %631 = vmatmul.mubr.f32.gmra.mrb[0].mxu0 %v280
        %v632 = vpop.f32.mrb[0].mxu0
        %v633 = vadd.f32 0.0, %v632
        %v634 = vpop.f32.mrb[0].mxu0
        %635 = vmatprep.mubr.f32.mxu0 %v283
        %636 = vmatmul.mubr.f32.gmra.mrb[0].mxu0 %v282
        %v637 = vpop.f32.mrb[0].mxu0
        %v638 = vadd.f32 0.0, %v637
        %v639 = vpop.f32.mrb[0].mxu0
        %640 = vmatprep.mubr.f32.mxu0 %v285
        %641 = vmatmul.mubr.f32.gmra.mrb[0].mxu0 %v284
        %v642 = vpop.f32.mrb[0].mxu0
        %v643 = vadd.f32 0.0, %v642
        %v644 = vpop.f32.mrb[0].mxu0
        %645 = vmatprep.mubr.f32.mxu0 %v287
        %646 = vmatmul.mubr.f32.gmra.mrb[0].mxu0 %v286
        %v647 = vpop.f32.mrb[0].mxu0
        %v648 = vadd.f32 0.0, %v647
        %v649 = vpop.f32.mrb[0].mxu0
        %650 = vmatprep.mubr.f32.mxu0 %v289
        %651 = vmatmul.mubr.f32.gmra.mrb[0].mxu0 %v288
        %v652 = vpop.f32.mrb[0].mxu0
        %v653 = vadd.f32 0.0, %v652
        %v654 = vpop.f32.mrb[0].mxu0
        %655 = vmatprep.mubr.f32.mxu0 %v291
        %656 = vmatmul.mubr.f32.gmra.mrb[0].mxu0 %v290
        %v657 = vpop.f32.mrb[0].mxu0
        %v658 = vadd.f32 0.0, %v657
        %v659 = vpop.f32.mrb[0].mxu0
        %660 = vmatprep.mubr.f32.mxu0 %v293
        %661 = vmatmul.mubr.f32.gmra.mrb[0].mxu0 %v292
        %v662 = vpop.f32.mrb[0].mxu0
        %v663 = vadd.f32 0.0, %v662
        %v664 = vpop.f32.mrb[0].mxu0
        %665 = vmatprep.mubr.f32.mxu0 %v295
        %666 = vmatmul.mubr.f32.gmra.mrb[0].mxu0 %v294
        %v667 = vpop.f32.mrb[0].mxu0
        %v668 = vadd.f32 0.0, %v667
        %v669 = vpop.f32.mrb[0].mxu0
        %670 = vmatprep.mubr.f32.mxu0 %v297
        %671 = vmatmul.mubr.f32.gmra.mrb[0].mxu0 %v296
        %v672 = vpop.f32.mrb[0].mxu0
        %v673 = vadd.f32 0.0, %v672
        %v674 = vpop.f32.mrb[0].mxu0
        %675 = vmatprep.mubr.f32.mxu0 %v299
        %676 = vmatmul.mubr.f32.gmra.mrb[0].mxu0 %v298
        %v677 = vpop.f32.mrb[0].mxu0
        %v678 = vadd.f32 0.0, %v677
        %v679 = vpop.f32.mrb[0].mxu0
        %680 = vmatprep.mubr.f32.mxu0 %v301
        %681 = vmatmul.mubr.f32.gmra.mrb[0].mxu0 %v300
        %v682 = vpop.f32.mrb[0].mxu0
        %v683 = vadd.f32 0.0, %v682
        %v684 = vpop.f32.mrb[0].mxu0
        %685 = vmatprep.mubr.f32.mxu0 %v303
        %686 = vmatmul.mubr.f32.gmra.mrb[0].mxu0 %v302
        %v687 = vpop.f32.mrb[0].mxu0
        %v688 = vadd.f32 0.0, %v687
        %v689 = vpop.f32.mrb[0].mxu0
        %690 = vmatprep.mubr.f32.mxu0 %v305
        %691 = vmatmul.mubr.f32.gmra.mrb[0].mxu0 %v304
        %v692 = vpop.f32.mrb[0].mxu0
        %v693 = vadd.f32 0.0, %v692
        %v694 = vpop.f32.mrb[0].mxu0
        %695 = vmatprep.mubr.f32.mxu0 %v307
        %696 = vmatmul.mubr.f32.gmra.mrb[0].mxu0 %v306
        %v697 = vpop.f32.mrb[0].mxu0
        %v698 = vadd.f32 0.0, %v697
        %v699 = vpop.f32.mrb[0].mxu0
        %700 = vmatprep.mubr.f32.mxu0 %v309
        %701 = vmatmul.mubr.f32.gmra.mrb[0].mxu0 %v308
        %v702 = vpop.f32.mrb[0].mxu0
        %v703 = vadd.f32 0.0, %v702
        %v704 = vpop.f32.mrb[0].mxu0
        %705 = vmatprep.mubr.f32.mxu0 %v311
        %706 = vmatmul.mubr.f32.gmra.mrb[0].mxu0 %v310
        %v707 = vpop.f32.mrb[0].mxu0
        %v708 = vadd.f32 0.0, %v707
        %v709 = vpop.f32.mrb[0].mxu0
        %710 = vmatprep.mubr.f32.mxu0 %v313
        %711 = vmatmul.mubr.f32.gmra.mrb[0].mxu0 %v312
        %v712 = vpop.f32.mrb[0].mxu0
        %v713 = vadd.f32 0.0, %v712
        %v714 = vpop.f32.mrb[0].mxu0
        %715 = vmatprep.mubr.f32.mxu0 %v315
        %716 = vmatmul.mubr.f32.gmra.mrb[0].mxu0 %v314
        %v717 = vpop.f32.mrb[0].mxu0
        %v718 = vadd.f32 0.0, %v717
        %v719 = vpop.f32.mrb[0].mxu0
        %720 = vmatprep.mubr.f32.mxu0 %v317
        %721 = vmatmul.mubr.f32.gmra.mrb[0].mxu0 %v316
        %v722 = vpop.f32.mrb[0].mxu0
        %v723 = vadd.f32 0.0, %v722
        %v724 = vpop.f32.mrb[0].mxu0
        %725 = vmatprep.mubr.f32.mxu0 %v319
        %726 = vmatmul.mubr.f32.gmra.mrb[0].mxu0 %v318
        %v727 = vpop.f32.mrb[0].mxu0
        %v728 = vadd.f32 0.0, %v727
        %v729 = vpop.f32.mrb[0].mxu0
        %730 = vmatprep.mubr.f32.mxu0 %v321
        %731 = vmatmul.mubr.f32.gmra.mrb[0].mxu0 %v320
        %v732 = vpop.f32.mrb[0].mxu0
        %v733 = vadd.f32 0.0, %v732
        %v734 = vpop.f32.mrb[0].mxu0
        %735 = vmatprep.mubr.f32.mxu0 %v323
        %736 = vmatmul.mubr.f32.gmra.mrb[0].mxu0 %v322
        %v737 = vpop.f32.mrb[0].mxu0
        %v738 = vadd.f32 0.0, %v737
        %v739 = vpop.f32.mrb[0].mxu0
        %740 = vdwg.mxu0
        %741 = vst [vmem:[%s184] sm:$0xff] %v423
        %742 = vst [vmem:[%s184 + $0x8] sm:$0xff] %v428
        %743 = vst [vmem:[%s184 + $0x10] sm:$0xff] %v433
        %744 = vst [vmem:[%s184 + $0x18] sm:$0xff] %v438
        %745 = vst [vmem:[%s184 + $0x20] sm:$0xff] %v443
        %746 = vst [vmem:[%s184 + $0x28] sm:$0xff] %v448
        %747 = vst [vmem:[%s184 + $0x30] sm:$0xff] %v453
        %748 = vst [vmem:[%s184 + $0x38] sm:$0xff] %v458
        %749 = vst [vmem:[%s184 + $0x40] sm:$0xff] %v463
        %750 = vst [vmem:[%s184 + $0x48] sm:$0xff] %v468
        %751 = vst [vmem:[%s184 + $0x50] sm:$0xff] %v473
        %752 = vst [vmem:[%s184 + $0x58] sm:$0xff] %v478
        %753 = vst [vmem:[%s184 + $0x60] sm:$0xff] %v483
        %754 = vst [vmem:[%s184 + $0x68] sm:$0xff] %v488
        %755 = vst [vmem:[%s184 + $0x70] sm:$0xff] %v493
        %756 = vst [vmem:[%s184 + $0x78] sm:$0xff] %v498
        %757 = vst [vmem:[%s184 + $0x80] sm:$0xff] %v503
        %758 = vst [vmem:[%s184 + $0x88] sm:$0xff] %v508
        %759 = vst [vmem:[%s184 + $0x90] sm:$0xff] %v513
        %760 = vst [vmem:[%s184 + $0x98] sm:$0xff] %v518
        %761 = vst [vmem:[%s184 + $0xa0] sm:$0xff] %v523
        %762 = vst [vmem:[%s184 + $0xa8] sm:$0xff] %v528
        %763 = vst [vmem:[%s184 + $0xb0] sm:$0xff] %v533
        %764 = vst [vmem:[%s184 + $0xb8] sm:$0xff] %v538
        %765 = vst [vmem:[%s184 + $0xc0] sm:$0xff] %v543
        %766 = vst [vmem:[%s184 + $0xc8] sm:$0xff] %v548
        %767 = vst [vmem:[%s184 + $0xd0] sm:$0xff] %v553
        %768 = vst [vmem:[%s184 + $0xd8] sm:$0xff] %v558
        %769 = vst [vmem:[%s184 + $0xe0] sm:$0xff] %v563
        %770 = vst [vmem:[%s184 + $0xe8] sm:$0xff] %v568
        %771 = vst [vmem:[%s184 + $0xf0] sm:$0xff] %v573
        %772 = vst [vmem:[%s184 + $0xf8] sm:$0xff] %v578
        %773 = vst [vmem:[%s184 + $0x100] sm:$0xff] %v583
        %774 = vst [vmem:[%s184 + $0x108] sm:$0xff] %v588
        %775 = vst [vmem:[%s184 + $0x110] sm:$0xff] %v593
        %776 = vst [vmem:[%s184 + $0x118] sm:$0xff] %v598
        %777 = vst [vmem:[%s184 + $0x120] sm:$0xff] %v603
        %778 = vst [vmem:[%s184 + $0x128] sm:$0xff] %v608
        %779 = vst [vmem:[%s184 + $0x130] sm:$0xff] %v613
        %780 = vst [vmem:[%s184 + $0x138] sm:$0xff] %v618
        %781 = vst [vmem:[%s184 + $0x140] sm:$0xff] %v623
        %782 = vst [vmem:[%s184 + $0x148] sm:$0xff] %v628
        %783 = vst [vmem:[%s184 + $0x150] sm:$0xff] %v633
        %784 = vst [vmem:[%s184 + $0x158] sm:$0xff] %v638
        %785 = vst [vmem:[%s184 + $0x160] sm:$0xff] %v643
        %786 = vst [vmem:[%s184 + $0x168] sm:$0xff] %v648
        %787 = vst [vmem:[%s184 + $0x170] sm:$0xff] %v653
        %788 = vst [vmem:[%s184 + $0x178] sm:$0xff] %v658
        %789 = vst [vmem:[%s184 + $0x180] sm:$0xff] %v663
        %790 = vst [vmem:[%s184 + $0x188] sm:$0xff] %v668
        %791 = vst [vmem:[%s184 + $0x190] sm:$0xff] %v673
        %792 = vst [vmem:[%s184 + $0x198] sm:$0xff] %v678
        %793 = vst [vmem:[%s184 + $0x1a0] sm:$0xff] %v683
        %794 = vst [vmem:[%s184 + $0x1a8] sm:$0xff] %v688
        %795 = vst [vmem:[%s184 + $0x1b0] sm:$0xff] %v693
        %796 = vst [vmem:[%s184 + $0x1b8] sm:$0xff] %v698
        %797 = vst [vmem:[%s184 + $0x1c0] sm:$0xff] %v703
        %798 = vst [vmem:[%s184 + $0x1c8] sm:$0xff] %v708
        %799 = vst [vmem:[%s184 + $0x1d0] sm:$0xff] %v713
        %800 = vst [vmem:[%s184 + $0x1d8] sm:$0xff] %v718
        %801 = vst [vmem:[%s184 + $0x1e0] sm:$0xff] %v723
        %802 = vst [vmem:[%s184 + $0x1e8] sm:$0xff] %v728
        %803 = vst [vmem:[%s184 + $0x1f0] sm:$0xff] %v733
        %804 = vst [vmem:[%s184 + $0x1f8] sm:$0xff] %v738
        %s805 = sand.u32 %s75, 1
        %s806 = scalar_lea.sflag [#allocation4], %s805
        %s807 = sand.u32 %s75, 1
        %s808 = smul.addr %s807, 512
        %s809 = scalar_lea.vmem [#allocation7], %s808
        // Predicated region
        $region37: #{tpu_custom_call.1} parent=27 // pred_check
          %p810 = pneg %p85
        $region38: #{tpu_custom_call.1} parent=27 // pred_check_branch
          %812 = sbr.rel (%p810) target = $region40
        $region39: #{tpu_custom_call.1} parent=27 // pred_region
          %s813 = smul.u32 64, %s20
          %s814 = ssub.s32 75, %s813
          %p815 = scmp.lt.s32.totalorder %s814, 64
          %s816 = scalar_select %p815, %s814, 64
          %s817 = smul.u32 128, %s816
          %s819 = ssub.s32 8192, %s817
          %820 = vsyncadd %s806, %s819
          %p821 = scmp.ne.s32.totalorder 0, %s817
          %s822 = smul.addr %s813, 128
          %s823 = scalar_lea.hbm %s2, %s822
          %s824 = smul.u32 8, %s816
          %s825 = sshll.u32 %s809, 4
          %s826 = int_to_ptr.vmem [resolvable:$true] %s825
          %s827 = sshll.u32 %s824, 4
          %831 = dma.vmem_to_hbm [thread:$0]  (%p821), %s826, %s827, %s823, %s806, 128, 128, 8
        $region40: #{tpu_custom_call.1} parent=27 // pred_fallthru
          _
      $region28: #{tpu_custom_call.1} parent=5 // pred_fallthru
        _
      %p832 = scmp.le.s32.totalorder 2, %s15
      // Predicated region
      $region41: #{tpu_custom_call.1} parent=5 // pred_check
        %p833 = pneg %p832
      $region42: #{tpu_custom_call.1} parent=5 // pred_check_branch
        %835 = sbr.rel (%p833) target = $region44
      $region43: #{tpu_custom_call.1} parent=5 // pred_region
        %s836 = ssub.s32 %s15, 2
        // Predicated region
        $region45: #{tpu_custom_call.1} parent=43 // pred_check
          %p837 = pneg %p91
        $region46: #{tpu_custom_call.1} parent=43 // pred_check_branch
          %839 = sbr.rel (%p837) target = $region48
        $region47: #{tpu_custom_call.1} parent=43 // pred_region
          %s840 = sand.u32 %s76, 1
          %s841 = scalar_lea.sflag [#allocation4], %s840
          %s842 = sand.u32 %s76, 1
          %s843 = smul.addr %s842, 512
          %s844 = scalar_lea.vmem [#allocation7], %s843
          %845 = dma.done %s841, 8192
        $region48: #{tpu_custom_call.1} parent=43 // pred_fallthru
          _
      $region44: #{tpu_custom_call.1} parent=5 // pred_fallthru
        _
    $region6: #{tpu_custom_call.1} parent=1 // loop_footer
      %s19 = sadd.s32 1, %s15
    $region7: #{tpu_custom_call.1} parent=1 // loop_footer_branch
      %14 = sbr.rel target = $region3
    $region8: #{tpu_custom_call.1} parent=1 // loop_exit
      _
    %846 = vsyncpa [#allocation3], 1
    %s847 = scalar_lea.sflag [#allocation3], 1
    %848 = vsyncpa %s847, 1
    %849 = vsyncpa [#allocation6], 1
    %850 = vsyncpa [#allocation4], 1
    %s851 = scalar_lea.sflag [#allocation4], 1
    %852 = vsyncpa %s851, 1

</llo_original>
